<compile_context>
chip_gen: v7x
topology: tpu7x:2x2x1
jax: 0.10.0
libtpu: 0.0.40
codegen_flags: <defaults>
</compile_context>

<pallas_src>
import functools

import jax
import jax.numpy as jnp
from jax.experimental import pallas as pl
from jax.experimental.pallas import tpu as pltpu

LANES = 128                 # vreg lane width; last dim of the (rows, 128) slab
DEFAULT_BLOCK_ROWS = 4096   # 2 MiB/input f32 block; raise to 8192 on v7x
CHUNK_ROWS = 128            # rows per inner-loop step (~16 live vregs/tensor)


def _round_up(a, b):
    return (a + b - 1) // b * b


def _sublane_multiple(dtype):
    # sub-32-bit dtypes pack along sublanes: f32 -> 8, bf16 -> 16, int8 -> 32
    return max(8, 32 // jnp.dtype(dtype).itemsize)


def _bce_kernel(n_rows, block_rows, chunk_rows, steps_per_split, unroll,
                x_ref, t_ref, acc_ref):
    """Accumulate the sum of stable BCE-with-logits losses per core split."""
    c = pl.program_id(0)      # core split (size 1 unless CORE_PARALLEL is used)
    i = pl.program_id(1)      # sequential reduction axis

    @pl.when(i == 0)
    def _():
        acc_ref[...] = jnp.zeros_like(acc_ref)

    g = c * steps_per_split + i                      # nominal global tile index
    rows_here = jnp.clip(n_rows - g * block_rows, 0, block_rows)

    n_chunks = block_rows // chunk_rows

    def chunk_loss(j):
        start = pl.multiple_of(j * chunk_rows, chunk_rows)
        x = x_ref[pl.ds(start, chunk_rows), :].astype(jnp.float32)
        z = t_ref[pl.ds(start, chunk_rows), :].astype(jnp.float32)
        # PyTorch BCEWithLogitsLoss, numerically stable form:
        #   loss = max(x, 0) - x*z + log1p(exp(-|x|))
        return jnp.maximum(x, 0.0) - x * z + jnp.log1p(jnp.exp(-jnp.abs(x)))

    def vreg_sum(l):
        # (chunk_rows, 128) -> (8, 128): pure VPU adds across vregs.
        return l.reshape(-1, 8, LANES).sum(axis=0)

    @pl.when(rows_here == block_rows)                # hot path: full tile
    def _():
        def body(j, carry):
            return carry + vreg_sum(chunk_loss(j))
        carry = jax.lax.fori_loop(0, n_chunks, body,
                                  jnp.zeros((8, LANES), jnp.float32),
                                  unroll=unroll)
        acc_ref[...] += carry[None]

    @pl.when(jnp.logical_and(rows_here > 0, rows_here < block_rows))
    def _():
        # Only the (at most one) ragged boundary tile pays for row masking.
        def body(j, carry):
            l = chunk_loss(j)
            row = jax.lax.broadcasted_iota(jnp.int32, l.shape, 0) + j * chunk_rows
            # select, NOT multiply: rows past n_rows in the boundary block are
            # uninitialized VMEM (possibly NaN/Inf); where() never propagates.
            l = jnp.where(row < rows_here, l, 0.0)
            return carry + vreg_sum(l)
        carry = jax.lax.fori_loop(0, n_chunks, body,
                                  jnp.zeros((8, LANES), jnp.float32),
                                  unroll=unroll)
        acc_ref[...] += carry[None]
    # rows_here == 0 (clamped overhang of a core split): skip compute entirely.


def bce_with_logits_loss_2d(logits, targets, *,
                            block_rows=DEFAULT_BLOCK_ROWS,
                            num_core_splits=1):
    """Equivalent of BCEWithLogitsLoss2d(weight=None, reduction='elementwise_mean').

    num_core_splits=2 adds a leading CORE_PARALLEL grid axis (use on v7x only;
    on single-TensorCore chips keep the default of 1).
    """
    # TODO(synk): per-element `weight` (module default is None) would be a
    # third broadcast input if ever needed; not implemented.
    assert logits.shape == targets.shape
    total_n = logits.size
    assert total_n > 0

    x = logits.reshape(-1)
    t = targets.reshape(-1)

    full_rows = total_n // LANES
    rem = total_n - full_rows * LANES

    loss_sum = jnp.zeros((), jnp.float32)

    # Non-lane-aligned tail (< 128 elements): compute directly in XLA instead
    # of padding (jnp.pad would copy the entire flattened array).
    if rem:
        xt = x[full_rows * LANES:].astype(jnp.float32)
        zt = t[full_rows * LANES:].astype(jnp.float32)
        tail = jnp.maximum(xt, 0.0) - xt * zt + jnp.log1p(jnp.exp(-jnp.abs(xt)))
        loss_sum = loss_sum + jnp.sum(tail)

    if full_rows:
        if rem:
            x_main = x[: full_rows * LANES]
            t_main = t[: full_rows * LANES]
        else:
            x_main, t_main = x, t
        x2 = x_main.reshape(full_rows, LANES)   # offset-0 reshape: copy-free
        t2 = t_main.reshape(full_rows, LANES)

        sub = max(_sublane_multiple(x2.dtype), _sublane_multiple(t2.dtype))
        block_rows = max(sub, min(block_rows, _round_up(full_rows, sub)))
        block_rows = _round_up(block_rows, sub)

        chunk_rows = CHUNK_ROWS
        while block_rows % chunk_rows:
            chunk_rows //= 2
        chunk_rows = min(chunk_rows, block_rows)
        n_chunks = block_rows // chunk_rows

        steps_total = pl.cdiv(full_rows, block_rows)
        n_splits = max(1, min(num_core_splits, steps_total))
        steps_per_split = pl.cdiv(steps_total, n_splits)

        def in_idx(c, i):
            # Clamp the overhang of the core split to the last real tile so
            # the DMA stays in bounds; the kernel skips compute there.
            return (jnp.minimum(c * steps_per_split + i, steps_total - 1), 0)

        kernel = functools.partial(
            _bce_kernel, full_rows, block_rows, chunk_rows, steps_per_split,
            min(4, n_chunks))

        itemsize = max(x2.dtype.itemsize, t2.dtype.itemsize)
        buf_bytes = 2 * 2 * block_rows * LANES * itemsize   # 2 inputs x 2 bufs
        vmem_limit = buf_bytes + (4 << 20) if buf_bytes > (12 << 20) else None

        first_axis = pltpu.CORE_PARALLEL if n_splits > 1 else pltpu.ARBITRARY

        partials = pl.pallas_call(
            kernel,
            out_shape=jax.ShapeDtypeStruct((n_splits, 8, LANES), jnp.float32),
            grid=(n_splits, steps_per_split),
            in_specs=[
                pl.BlockSpec((block_rows, LANES), in_idx),
                pl.BlockSpec((block_rows, LANES), in_idx),
            ],
            # Output block is constant along the reduction axis -> VMEM-resident
            # (8,128) accumulator per core split (P3 pattern).
            out_specs=pl.BlockSpec((1, 8, LANES), lambda c, i: (c, 0, 0)),
            compiler_params=pltpu.CompilerParams(
                dimension_semantics=(first_axis, pltpu.ARBITRARY),
                vmem_limit_bytes=vmem_limit,
            ),
        )(x2, t2)
        loss_sum = loss_sum + jnp.sum(partials)

    # reduction='elementwise_mean' (old spelling of 'mean')
    return loss_sum / jnp.float32(total_n)


def _reference_loss(logits, targets):
    x = logits.reshape(-1).astype(jnp.float32)
    z = targets.reshape(-1).astype(jnp.float32)
    loss = jnp.maximum(x, 0.0) - x * z + jnp.log1p(jnp.exp(-jnp.abs(x)))
    return jnp.mean(loss)


if __name__ == "__main__":
    key = jax.random.PRNGKey(0)
    k1, k2, k3, k4 = jax.random.split(key, 4)

    # 1) NCHW inputs, lane-aligned size: single full tile (hot path).
    logits = jax.random.normal(k1, (2, 4, 16, 16), dtype=jnp.float32)
    targets = (jax.random.uniform(k2, (2, 4, 16, 16)) > 0.5).astype(jnp.float32)
    ref = _reference_loss(logits, targets)

    loss = bce_with_logits_loss_2d(logits, targets)
    jax.block_until_ready(loss)
    assert jnp.allclose(loss, ref, rtol=1e-5, atol=1e-5), (loss, ref)

    # 2) Tiny block -> multi-step accumulation along the sequential grid axis.
    loss2 = bce_with_logits_loss_2d(logits, targets, block_rows=8)
    jax.block_until_ready(loss2)
    assert jnp.allclose(loss2, ref, rtol=1e-5, atol=1e-5), (loss2, ref)

    # 3) Ragged size (not a multiple of 128): XLA tail + masked boundary block,
    #    once as a single block and once as a multi-step grid.
    logits3 = jax.random.normal(k3, (2, 4, 33, 33), dtype=jnp.float32)
    targets3 = (jax.random.uniform(k4, (2, 4, 33, 33)) > 0.5).astype(jnp.float32)
    ref3 = _reference_loss(logits3, targets3)

    loss3 = bce_with_logits_loss_2d(logits3, targets3)
    loss3b = bce_with_logits_loss_2d(logits3, targets3, block_rows=8)
    jax.block_until_ready((loss3, loss3b))
    assert jnp.allclose(loss3, ref3, rtol=1e-5, atol=1e-5), (loss3, ref3)
    assert jnp.allclose(loss3b, ref3, rtol=1e-5, atol=1e-5), (loss3b, ref3)

    # 4) bf16 inputs fed natively (no wrapper upcast); f32 math inside kernel.
    logits4 = logits.astype(jnp.bfloat16)
    targets4 = targets.astype(jnp.bfloat16)
    ref4 = _reference_loss(logits4, targets4)
    loss4 = bce_with_logits_loss_2d(logits4, targets4)
    jax.block_until_ready(loss4)
    assert jnp.allclose(loss4, ref4, rtol=1e-4, atol=1e-4), (loss4, ref4)

    print("KERNEL_OK")
</pallas_src>

<mosaic_0001>
module attributes {stable_mosaic.version = 11 : i64} {
  func.func @_bce_kernel(%arg0: i32, %arg1: i32, %arg2: memref<16x128xf32, #tpu.memory_space<vmem>>, %arg3: memref<16x128xf32, #tpu.memory_space<vmem>>, %arg4: memref<1x8x128xf32, #tpu.memory_space<vmem>>) attributes {dimension_semantics = [#tpu.dimension_semantics<arbitrary>, #tpu.dimension_semantics<arbitrary>], iteration_bounds = array<i64: 1, 1>, scalar_prefetch = 0 : i64, scratch_operands = 0 : i64, tpu.core_type = #tpu.core_type<tc>, window_params = [{transform_indices = @transform_0, window_bounds = array<i64: 16, 128>}, {transform_indices = @transform_1, window_bounds = array<i64: 16, 128>}, {transform_indices = @transform_2, window_bounds = array<i64: 1, 8, 128>}]} {
    %c0_i32 = arith.constant 0 : i32
    %0 = arith.cmpi eq, %arg1, %c0_i32 : i32
    %1 = arith.extui %0 : i1 to i32
    %c0_i32_0 = arith.constant 0 : i32
    %2 = arith.cmpi ne, %1, %c0_i32_0 : i32
    scf.if %2 {
      %cst = arith.constant 0.000000e+00 : f32
      %17 = vector.broadcast %cst : f32 to vector<1x8x128xf32>
      %c0 = arith.constant 0 : index
      %c0_9 = arith.constant 0 : index
      %c0_10 = arith.constant 0 : index
      %18 = vector.load %arg4[%c0, %c0_9, %c0_10] : memref<1x8x128xf32, #tpu.memory_space<vmem>>, vector<1x8x128xf32>
      tpu.vector_store %arg4[%c0, %c0_9, %c0_10], %17 {strides = array<i32>} : memref<1x8x128xf32, #tpu.memory_space<vmem>>, vector<1x8x128xf32>,
    } else {
    }
    %c1_i32 = arith.constant 1 : i32
    %3 = arith.muli %arg0, %c1_i32 : i32
    %4 = arith.addi %3, %arg1 : i32
    %c16_i32 = arith.constant 16 : i32
    %5 = arith.muli %4, %c16_i32 : i32
    %c16_i32_1 = arith.constant 16 : i32
    %6 = arith.subi %c16_i32_1, %5 : i32
    %c0_i32_2 = arith.constant 0 : i32
    %c16_i32_3 = arith.constant 16 : i32
    %7 = arith.maxsi %c0_i32_2, %6 : i32
    %8 = arith.minsi %c16_i32_3, %7 : i32
    %c16_i32_4 = arith.constant 16 : i32
    %9 = arith.cmpi eq, %8, %c16_i32_4 : i32
    %10 = arith.extui %9 : i1 to i32
    %c0_i32_5 = arith.constant 0 : i32
    %11 = arith.cmpi ne, %10, %c0_i32_5 : i32
    scf.if %11 {
      %cst = arith.constant 0.000000e+00 : f32
      %17 = vector.broadcast %cst : f32 to vector<8x128xf32>
      %c0_i32_9 = arith.constant 0 : i32
      %c16_i32_10 = arith.constant 16 : i32
      %18 = arith.muli %c0_i32_9, %c16_i32_10 : i32
      %19 = tpu.assume_multiple %18, 16 : i32
      %20 = arith.index_cast %19 : i32 to index
      %c0 = arith.constant 0 : index
      %21 = vector.load %arg2[%20, %c0] : memref<16x128xf32, #tpu.memory_space<vmem>>, vector<16x128xf32>
      %22 = arith.index_cast %19 : i32 to index
      %c0_11 = arith.constant 0 : index
      %23 = vector.load %arg3[%22, %c0_11] : memref<16x128xf32, #tpu.memory_space<vmem>>, vector<16x128xf32>
      %cst_12 = arith.constant 0.000000e+00 : f32
      %24 = vector.broadcast %cst_12 : f32 to vector<16x128xf32>
      %25 = arith.maximumf %21, %24 : vector<16x128xf32>
      %26 = arith.mulf %21, %23 : vector<16x128xf32>
      %27 = arith.subf %25, %26 : vector<16x128xf32>
      %28 = math.absf %21 : vector<16x128xf32>
      %cst_13 = arith.constant 0.000000e+00 : f32
      %29 = vector.broadcast %cst_13 : f32 to vector<16x128xf32>
      %30 = arith.subf %29, %28 : vector<16x128xf32>
      %31 = math.exp %30 : vector<16x128xf32>
      %32 = math.log1p %31 : vector<16x128xf32>
      %33 = arith.addf %27, %32 : vector<16x128xf32>
      %34 = vector.shape_cast %33 : vector<16x128xf32> to vector<2x8x128xf32>
      %cst_14 = arith.constant dense<0.000000e+00> : vector<8x128xf32>
      %35 = vector.multi_reduction <add>, %34, %cst_14 [0] : vector<2x8x128xf32> to vector<8x128xf32>
      %36 = arith.addf %17, %35 : vector<8x128xf32>
      %c1_i32_15 = arith.constant 1 : i32
      %c0_16 = arith.constant 0 : index
      %c0_17 = arith.constant 0 : index
      %c0_18 = arith.constant 0 : index
      %37 = vector.load %arg4[%c0_16, %c0_17, %c0_18] : memref<1x8x128xf32, #tpu.memory_space<vmem>>, vector<1x8x128xf32>
      %38 = vector.shape_cast %36 : vector<8x128xf32> to vector<1x8x128xf32>
      %39 = arith.addf %37, %38 : vector<1x8x128xf32>
      %c0_19 = arith.constant 0 : index
      %c0_20 = arith.constant 0 : index
      %c0_21 = arith.constant 0 : index
      %40 = vector.load %arg4[%c0_19, %c0_20, %c0_21] : memref<1x8x128xf32, #tpu.memory_space<vmem>>, vector<1x8x128xf32>
      tpu.vector_store %arg4[%c0_19, %c0_20, %c0_21], %39 {strides = array<i32>} : memref<1x8x128xf32, #tpu.memory_space<vmem>>, vector<1x8x128xf32>,
    } else {
    }
    %c0_i32_6 = arith.constant 0 : i32
    %12 = arith.cmpi sgt, %8, %c0_i32_6 : i32
    %c16_i32_7 = arith.constant 16 : i32
    %13 = arith.cmpi slt, %8, %c16_i32_7 : i32
    %14 = arith.andi %12, %13 : i1
    %15 = arith.extui %14 : i1 to i32
    %c0_i32_8 = arith.constant 0 : i32
    %16 = arith.cmpi ne, %15, %c0_i32_8 : i32
    scf.if %16 {
      %cst = arith.constant 0.000000e+00 : f32
      %17 = vector.broadcast %cst : f32 to vector<8x128xf32>
      %c0_i32_9 = arith.constant 0 : i32
      %c16_i32_10 = arith.constant 16 : i32
      %18 = arith.muli %c0_i32_9, %c16_i32_10 : i32
      %19 = tpu.assume_multiple %18, 16 : i32
      %20 = arith.index_cast %19 : i32 to index
      %c0 = arith.constant 0 : index
      %21 = vector.load %arg2[%20, %c0] : memref<16x128xf32, #tpu.memory_space<vmem>>, vector<16x128xf32>
      %22 = arith.index_cast %19 : i32 to index
      %c0_11 = arith.constant 0 : index
      %23 = vector.load %arg3[%22, %c0_11] : memref<16x128xf32, #tpu.memory_space<vmem>>, vector<16x128xf32>
      %cst_12 = arith.constant 0.000000e+00 : f32
      %24 = vector.broadcast %cst_12 : f32 to vector<16x128xf32>
      %25 = arith.maximumf %21, %24 : vector<16x128xf32>
      %26 = arith.mulf %21, %23 : vector<16x128xf32>
      %27 = arith.subf %25, %26 : vector<16x128xf32>
      %28 = math.absf %21 : vector<16x128xf32>
      %cst_13 = arith.constant 0.000000e+00 : f32
      %29 = vector.broadcast %cst_13 : f32 to vector<16x128xf32>
      %30 = arith.subf %29, %28 : vector<16x128xf32>
      %31 = math.exp %30 : vector<16x128xf32>
      %32 = math.log1p %31 : vector<16x128xf32>
      %33 = arith.addf %27, %32 : vector<16x128xf32>
      %34 = tpu.iota {dimensions = array<i32: 0>} : vector<16x128xi32>
      %c16_i32_14 = arith.constant 16 : i32
      %35 = arith.muli %c0_i32_9, %c16_i32_14 : i32
      %36 = vector.broadcast %35 : i32 to vector<16x128xi32>
      %37 = arith.addi %34, %36 : vector<16x128xi32>
      %38 = vector.broadcast %8 : i32 to vector<16x128xi32>
      %39 = arith.cmpi slt, %37, %38 : vector<16x128xi32>
      %cst_15 = arith.constant 0.000000e+00 : f32
      %40 = vector.broadcast %cst_15 : f32 to vector<16x128xf32>
      %41 = arith.select %39, %33, %40 : vector<16x128xi1>, vector<16x128xf32>
      %42 = vector.shape_cast %41 : vector<16x128xf32> to vector<2x8x128xf32>
      %cst_16 = arith.constant dense<0.000000e+00> : vector<8x128xf32>
      %43 = vector.multi_reduction <add>, %42, %cst_16 [0] : vector<2x8x128xf32> to vector<8x128xf32>
      %44 = arith.addf %17, %43 : vector<8x128xf32>
      %c1_i32_17 = arith.constant 1 : i32
      %c0_18 = arith.constant 0 : index
      %c0_19 = arith.constant 0 : index
      %c0_20 = arith.constant 0 : index
      %45 = vector.load %arg4[%c0_18, %c0_19, %c0_20] : memref<1x8x128xf32, #tpu.memory_space<vmem>>, vector<1x8x128xf32>
      %46 = vector.shape_cast %44 : vector<8x128xf32> to vector<1x8x128xf32>
      %47 = arith.addf %45, %46 : vector<1x8x128xf32>
      %c0_21 = arith.constant 0 : index
      %c0_22 = arith.constant 0 : index
      %c0_23 = arith.constant 0 : index
      %48 = vector.load %arg4[%c0_21, %c0_22, %c0_23] : memref<1x8x128xf32, #tpu.memory_space<vmem>>, vector<1x8x128xf32>
      tpu.vector_store %arg4[%c0_21, %c0_22, %c0_23], %47 {strides = array<i32>} : memref<1x8x128xf32, #tpu.memory_space<vmem>>, vector<1x8x128xf32>,
    } else {
    }
    return
  }
  func.func @transform_0(%arg0: i32, %arg1: i32) -> (i32, i32) {
    %c1_i32 = arith.constant 1 : i32
    %0 = arith.muli %arg0, %c1_i32 : i32
    %1 = arith.addi %0, %arg1 : i32
    %c0_i32 = arith.constant 0 : i32
    %2 = arith.minsi %1, %c0_i32 : i32
    %c0_i32_0 = arith.constant 0 : i32
    %c0_i32_1 = arith.constant 0 : i32
    return %2, %c0_i32_0 : i32, i32
  }
  func.func @transform_1(%arg0: i32, %arg1: i32) -> (i32, i32) {
    %c1_i32 = arith.constant 1 : i32
    %0 = arith.muli %arg0, %c1_i32 : i32
    %1 = arith.addi %0, %arg1 : i32
    %c0_i32 = arith.constant 0 : i32
    %2 = arith.minsi %1, %c0_i32 : i32
    %c0_i32_0 = arith.constant 0 : i32
    %c0_i32_1 = arith.constant 0 : i32
    return %2, %c0_i32_0 : i32, i32
  }
  func.func @transform_2(%arg0: i32, %arg1: i32) -> (i32, i32, i32) {
    %c0_i32 = arith.constant 0 : i32
    %c0_i32_0 = arith.constant 0 : i32
    %c0_i32_1 = arith.constant 0 : i32
    return %arg0, %c0_i32, %c0_i32_0 : i32, i32, i32
  }
}

</mosaic_0001>

<llo_original>
// kernel: tpu_custom_call.1
$region0: #{tpu_custom_call.1}
  #allocation0 [shape = 'u32[]', space=smem, size = 0x4, offset = 0x4, fixed_abs, tag = 'smem constant byte address 0x4 - core index']
  #allocation1 [shape = 'u32[144,128]{1,0:T(1,128)}', space=vmem, size = 0x12000, scoped, tag = 'internal scratch']
  %s0 = inlined_call_operand.hbm [shape: f32[16,128], index: 0, kind: input, shape index: {}]
  %s1 = inlined_call_operand.hbm [shape: f32[16,128], index: 1, kind: input, shape index: {}]
  %s2 = inlined_call_operand.hbm [shape: f32[1,8,128], index: 2, kind: output, shape index: {}]
  %s3 = sld [smem:[#allocation0]]
  $region38: #{tpu_custom_call.1} parent=0
    _
  %s5 = ssub.s32 1, %s3
  %s6 = scalar_select 0, %s5, %s3
  $region1: #{tpu_custom_call.1} parent=0
    #allocation2 [shape = 'u8[8192]{0}', space=vmem, size = 0x2000, scoped, tag = 'input window, operand 0, single buffered']
    #allocation3 [shape = 's32[1]{0}', space=sflag, size = 0x4, scoped, tag = 'scoped memory for tpu_custom_call.1']
    #allocation4 [shape = 's32[1]{0}', space=sflag, size = 0x4, scoped, tag = 'scoped memory for tpu_custom_call.1']
    #allocation5 [shape = 'u8[8192]{0}', space=vmem, size = 0x2000, scoped, tag = 'input window, operand 1, single buffered']
    #allocation6 [shape = 's32[1]{0}', space=sflag, size = 0x4, scoped, tag = 'scoped memory for tpu_custom_call.1']
    #allocation7 [shape = 'u8[4096]{0}', space=vmem, size = 0x1000, scoped, tag = 'output window, operand 0, single buffered']
    %7 = vsyncpa [#allocation3], 0
    %8 = vsyncpa [#allocation6], 0
    %9 = vsyncpa [#allocation4], 0
    // Predicated region
    $region2: #{tpu_custom_call.1} parent=1 // pred_check
      _
    $region3: #{tpu_custom_call.1} parent=1 // pred_check_branch
      %11 = sbr.rel (0) target = $region5
    $region4: #{tpu_custom_call.1} parent=1 // pred_region
      %s12 = sadd.s32 0, 0
      %p13 = scmp.lt.s32.totalorder %s12, 0
      %s14 = scalar_select %p13, %s12, 0
      %s15 = smul.u32 2, %s14
      %s17 = ssub.s32 256, 256
      %18 = vsyncadd [#allocation3], %s17
      %s19 = smul.addr %s15, 128
      %s20 = scalar_lea.hbm %s0, %s19
      %s21 = sshll.u32 [#allocation2], 4
      %s22 = int_to_ptr.vmem [resolvable:$true] %s21
      %27 = dma.hbm_to_vmem [thread:$0]  %s20, 256, %s22, [#allocation3], 128, 128, 8
    $region5: #{tpu_custom_call.1} parent=1 // pred_fallthru
      _
    // Predicated region
    $region6: #{tpu_custom_call.1} parent=1 // pred_check
      _
    $region7: #{tpu_custom_call.1} parent=1 // pred_check_branch
      %29 = sbr.rel (0) target = $region9
    $region8: #{tpu_custom_call.1} parent=1 // pred_region
      %s30 = sadd.s32 0, 0
      %p31 = scmp.lt.s32.totalorder %s30, 0
      %s32 = scalar_select %p31, %s30, 0
      %s33 = smul.u32 2, %s32
      %s35 = ssub.s32 256, 256
      %36 = vsyncadd [#allocation6], %s35
      %s37 = smul.addr %s33, 128
      %s38 = scalar_lea.hbm %s1, %s37
      %s39 = sshll.u32 [#allocation5], 4
      %s40 = int_to_ptr.vmem [resolvable:$true] %s39
      %45 = dma.hbm_to_vmem [thread:$0]  %s38, 256, %s40, [#allocation6], 128, 128, 8
    $region9: #{tpu_custom_call.1} parent=1 // pred_fallthru
      _
    // Predicated region
    $region10: #{tpu_custom_call.1} parent=1 // pred_check
      _
    $region11: #{tpu_custom_call.1} parent=1 // pred_check_branch
      %47 = sbr.rel (0) target = $region13
    $region12: #{tpu_custom_call.1} parent=1 // pred_region
      %48 = dma.done [#allocation3], 256
    $region13: #{tpu_custom_call.1} parent=1 // pred_fallthru
      _
    // Predicated region
    $region14: #{tpu_custom_call.1} parent=1 // pred_check
      _
    $region15: #{tpu_custom_call.1} parent=1 // pred_check_branch
      %50 = sbr.rel (0) target = $region17
    $region16: #{tpu_custom_call.1} parent=1 // pred_region
      %51 = dma.done [#allocation6], 256
    $region17: #{tpu_custom_call.1} parent=1 // pred_fallthru
      _
    %s52 = sadd.s32 0, 0
    %p53 = scmp.lt.s32.totalorder %s52, 0
    %s54 = scalar_select %p53, %s52, 0
    %s55 = smul.u32 2, %s54
    %s56 = sadd.s32 0, 0
    %p57 = scmp.lt.s32.totalorder %s56, 0
    %s58 = scalar_select %p57, %s56, 0
    %s59 = smul.u32 2, %s58
    %p60 = scmp.eq.s32.totalorder 0, 0
    // Predicated region
    $region18: #{tpu_custom_call.1} parent=1 // pred_check
      %p61 = pneg %p60
    $region19: #{tpu_custom_call.1} parent=1 // pred_check_branch
      %63 = sbr.rel (%p61) target = $region21
    $region20: #{tpu_custom_call.1} parent=1 // pred_region
      %64 = vst [vmem:[#allocation7] sm:$0xff] 0.0
    $region21: #{tpu_custom_call.1} parent=1 // pred_fallthru
      _
    %s65 = sadd.s32 0, 0
    %s66 = smul.u32 %s65, 16
    %s67 = ssub.s32 16, %s66
    %p68 = scmp.gt.s32.totalorder %s67, 0
    %s69 = scalar_select %p68, %s67, 0
    %p70 = scmp.lt.s32.totalorder %s69, 16
    %s71 = scalar_select %p70, %s69, 16
    %p72 = scmp.eq.s32.totalorder %s71, 16
    // Predicated region
    $region22: #{tpu_custom_call.1} parent=1 // pred_check
      %p73 = pneg %p72
    $region23: #{tpu_custom_call.1} parent=1 // pred_check_branch
      %75 = sbr.rel (%p73) target = $region25
    $region24: #{tpu_custom_call.1} parent=1 // pred_region
      %v76 = vld [vmem:[#allocation2] sm:$0xff]
      %v77 = vld [vmem:[#allocation2 + $0x8] sm:$0xff]
      %v78 = vld [vmem:[#allocation5] sm:$0xff]
      %v79 = vld [vmem:[#allocation5 + $0x8] sm:$0xff]
      %v80 = vmax.f32 %v76, 0.0
      %v81 = vmax.f32 %v77, 0.0
      %v82 = vmul.f32 %v76, %v78
      %v83 = vmul.f32 %v77, %v79
      %v84 = vsub.f32 %v80, %v82
      %v85 = vsub.f32 %v81, %v83
      %v86 = vand.u32 2147483647, %v76
      %v87 = vand.u32 2147483647, %v77
      %v88 = vsub.f32 0.0, %v86
      %v89 = vsub.f32 0.0, %v87
      %v90 = vmul.f32 %v88, 1.442695
      %v91 = vpow.pop %v90
      %v92 = vmul.f32 %v89, 1.442695
      %v93 = vpow.pop %v92
      %v94 = vadd.f32 %v91, 1.0
      %v95 = vlog2.pop %v94
      %v96 = vmul.f32 %v95, 0.6931472
      %v97 = vmul.f32 -0.5, %v91
      %v98 = vadd.f32 %v97, 1.0
      %v99 = vmul.f32 %v98, %v91
      %v100 = vand.u32 2147483647, %v91
      %vm101 = vcmp.lt.f32.partialorder %v100, 0.0004427343
      %v102 = vsel %vm101, %v99, %v96
      %v103 = vadd.f32 %v93, 1.0
      %v104 = vlog2.pop %v103
      %v105 = vmul.f32 %v104, 0.6931472
      %v106 = vmul.f32 -0.5, %v93
      %v107 = vadd.f32 %v106, 1.0
      %v108 = vmul.f32 %v107, %v93
      %v109 = vand.u32 2147483647, %v93
      %vm110 = vcmp.lt.f32.partialorder %v109, 0.0004427343
      %v111 = vsel %vm110, %v108, %v105
      %v112 = vadd.f32 %v84, %v102
      %v113 = vadd.f32 %v85, %v111
      %v114 = vadd.f32 %v112, %v113
      %v115 = vadd.f32 %v114, 0.0
      %v116 = vld [vmem:[#allocation7] sm:$0xff]
      %v117 = vadd.f32 %v116, %v115
      %118 = vst [vmem:[#allocation7] sm:$0xff] %v117
    $region25: #{tpu_custom_call.1} parent=1 // pred_fallthru
      _
    %p119 = scmp.gt.s32.totalorder %s71, 0
    %p120 = scmp.lt.s32.totalorder %s71, 16
    %p121 = pnand %p119, %p120
    %p122 = pneg %p121
    // Predicated region
    $region26: #{tpu_custom_call.1} parent=1 // pred_check
      _
    $region27: #{tpu_custom_call.1} parent=1 // pred_check_branch
      %124 = sbr.rel (%p121) target = $region29
    $region28: #{tpu_custom_call.1} parent=1 // pred_region
      %v125 = vld [vmem:[#allocation2] sm:$0xff]
      %v126 = vld [vmem:[#allocation2 + $0x8] sm:$0xff]
      %v127 = vld [vmem:[#allocation5] sm:$0xff]
      %v128 = vld [vmem:[#allocation5 + $0x8] sm:$0xff]
      %v129 = vmax.f32 %v125, 0.0
      %v130 = vmax.f32 %v126, 0.0
      %v131 = vmul.f32 %v125, %v127
      %v132 = vmul.f32 %v126, %v128
      %v133 = vsub.f32 %v129, %v131
      %v134 = vsub.f32 %v130, %v132
      %v135 = vand.u32 2147483647, %v125
      %v136 = vand.u32 2147483647, %v126
      %v137 = vsub.f32 0.0, %v135
      %v138 = vsub.f32 0.0, %v136
      %v139 = vmul.f32 %v137, 1.442695
      %v140 = vpow.pop %v139
      %v141 = vmul.f32 %v138, 1.442695
      %v142 = vpow.pop %v141
      %v143 = vadd.f32 %v140, 1.0
      %v144 = vlog2.pop %v143
      %v145 = vmul.f32 %v144, 0.6931472
      %v146 = vmul.f32 -0.5, %v140
      %v147 = vadd.f32 %v146, 1.0
      %v148 = vmul.f32 %v147, %v140
      %v149 = vand.u32 2147483647, %v140
      %vm150 = vcmp.lt.f32.partialorder %v149, 0.0004427343
      %v151 = vsel %vm150, %v148, %v145
      %v152 = vadd.f32 %v142, 1.0
      %v153 = vlog2.pop %v152
      %v154 = vmul.f32 %v153, 0.6931472
      %v155 = vmul.f32 -0.5, %v142
      %v156 = vadd.f32 %v155, 1.0
      %v157 = vmul.f32 %v156, %v142
      %v158 = vand.u32 2147483647, %v142
      %vm159 = vcmp.lt.f32.partialorder %v158, 0.0004427343
      %v160 = vsel %vm159, %v157, %v154
      %v161 = vadd.f32 %v133, %v151
      %v162 = vadd.f32 %v134, %v160
      %v163 = vlaneseq
      %v164 = vshrl.u32 %v163, 7
      %v165 = vadd.s32 %v164, 8
      %v166 = vstv %s71
      %vm167 = vcmp.lt.s32.totalorder %v164, %v166
      %vm168 = vcmp.lt.s32.totalorder %v165, %v166
      %v169 = vsel %vm167, %v161, 0.0
      %v170 = vsel %vm168, %v162, 0.0
      %v171 = vadd.f32 %v169, %v170
      %v172 = vadd.f32 %v171, 0.0
      %v173 = vld [vmem:[#allocation7] sm:$0xff]
      %v174 = vadd.f32 %v173, %v172
      %175 = vst [vmem:[#allocation7] sm:$0xff] %v174
    $region29: #{tpu_custom_call.1} parent=1 // pred_fallthru
      _
    // Predicated region
    $region30: #{tpu_custom_call.1} parent=1 // pred_check
      _
    $region31: #{tpu_custom_call.1} parent=1 // pred_check_branch
      %177 = sbr.rel (0) target = $region33
    $region32: #{tpu_custom_call.1} parent=1 // pred_region
      %s179 = ssub.s32 128, 128
      %180 = vsyncadd [#allocation4], %s179
      %s182 = sshll.u32 [#allocation7], 4
      %s183 = int_to_ptr.vmem [resolvable:$true] %s182
      %185 = dma.vmem_to_hbm [thread:$0]  %s183, 128, %s2, [#allocation4]
    $region33: #{tpu_custom_call.1} parent=1 // pred_fallthru
      _
    // Predicated region
    $region34: #{tpu_custom_call.1} parent=1 // pred_check
      _
    $region35: #{tpu_custom_call.1} parent=1 // pred_check_branch
      %187 = sbr.rel (0) target = $region37
    $region36: #{tpu_custom_call.1} parent=1 // pred_region
      %188 = dma.done [#allocation4], 128
    $region37: #{tpu_custom_call.1} parent=1 // pred_fallthru
      _
    %189 = vsyncpa [#allocation3], 1
    %190 = vsyncpa [#allocation6], 1
    %191 = vsyncpa [#allocation4], 1

</llo_original>
